<compile_context>
chip_gen: v5e
topology: v5e:2x2
jax: 0.10.0
libtpu: 0.0.40
codegen_flags: <defaults>
</compile_context>

<pallas_src>
import functools

import jax
import jax.numpy as jnp
from jax.experimental import pallas as pl
from jax.experimental.pallas import tpu as pltpu

MARGIN = 0.5


def _round_up(x, m):
    return (x + m - 1) // m * m


def _newton_recip(x):
    # approx reciprocal rides the EUP slot; one Newton step restores ~f32 accuracy
    r = pl.reciprocal(x, approx=True)
    return r * (2.0 - x * r)


def _triplet_tile_kernel(xi_ref, xjt_ref, sqi_ref, sqj_ref, yci_ref, yrj_ref,
                         hinge_ref, ap_acc, row_acc, cnt_acc,
                         *, n, n_pad, acc_w, groups, margin):
    j = pl.program_id(1)

    @pl.when(j == 0)
    def _():
        ap_acc[...] = jnp.zeros_like(ap_acc)
        row_acc[...] = jnp.zeros_like(row_acc)
        cnt_acc[...] = jnp.zeros_like(cnt_acc)

    # Gram tile: native-dtype (M,K) x (K,N) on the MXU with f32 accumulation.
    gram = jax.lax.dot_general(
        xi_ref[...], xjt_ref[...], (((1,), (0,)), ((), ())),
        preferred_element_type=jnp.float32)                       # (tm, tn)

    dist2 = sqi_ref[...] + sqj_ref[...] - 2.0 * gram
    dist = jnp.sqrt(jnp.maximum(dist2, 1e-10))                    # clamp(1e-10).sqrt()
    same = (yci_ref[...] == yrj_ref[...]).astype(jnp.float32)     # (tm, tn)

    def fold(t):
        # Fold lane groups into (tm, acc_w) with pure vreg adds (static,
        # lane-aligned slices -> no relayout, no XLU).
        out = t[:, 0:acc_w]
        for g in range(1, groups):
            out = out + t[:, g * acc_w:(g + 1) * acc_w]
        return out

    ap_acc[...] += fold(dist * same)
    row_acc[...] += fold(dist)
    cnt_acc[...] += fold(same)

    @pl.when(j == pl.num_programs(1) - 1)
    def _():
        ap_sum = jnp.sum(ap_acc[...], axis=1, keepdims=True)      # (tm, 1)
        row_sum = jnp.sum(row_acc[...], axis=1, keepdims=True)
        ap_cnt = jnp.sum(cnt_acc[...], axis=1, keepdims=True)
        if n_pad != n:   # static: padded-column correction, once per anchor block
            # each zero-feature padded candidate contributed exactly
            # sqrt(max(|x_i|^2, 1e-10)) to row_sum and 0 to ap_sum / ap_cnt.
            row_sum = row_sum - jnp.float32(n_pad - n) * jnp.sqrt(
                jnp.maximum(sqi_ref[...], 1e-10))
        an_sum = row_sum - ap_sum                                  # fused negative side
        an_cnt = jnp.float32(n) - ap_cnt
        # clamp counts >= 1: padded anchor rows stay finite (sliced off outside);
        # a single-label batch gives dist_an = 0 instead of NaN.
        dist_ap = ap_sum * _newton_recip(jnp.maximum(ap_cnt, 1.0))
        dist_an = an_sum * _newton_recip(jnp.maximum(an_cnt, 1.0))
        # MarginRankingLoss(dist_an, dist_ap, y=1) per anchor:
        hinge_ref[...] = jnp.maximum(dist_ap - dist_an + margin, 0.0)


def _vmem_limit_bytes():
    cap = None
    try:
        cap = getattr(pltpu.get_tpu_info(), "vmem_capacity_bytes", None)
    except Exception:
        cap = None
    if cap is None:
        cap = 64 * 1024 * 1024
    if cap >= 100 * 1024 * 1024:
        return 100 * 1024 * 1024          # v5e / v6e: 128 MiB physical
    return 48 * 1024 * 1024               # v7x: 64 MiB per TC, leave headroom


def _pick_tiles(n, d_pad, itemsize, vmem_budget):
    n8 = _round_up(n, 8)
    if n8 <= 256:
        if n8 < 16:
            tm = tn = n_pad = n8
        else:
            # >= 2 anchor blocks so the "parallel" i axis shards across
            # v7x's two TensorCores (harmless on single-TC v5e/v6e).
            tm = _round_up((n8 + 1) // 2, 8)
            n_pad = 2 * tm
            tn = n_pad
        return tm, tn, n_pad

    tn = 256                              # matches the 256-wide MXU on v6e/v7x
    n_pad = _round_up(n, tn)

    def fits(tm):
        acc_w = 128 if tn % 128 == 0 else tn
        need = 2 * (tm * d_pad + d_pad * tn) * itemsize   # double-buffered x blocks
        need += 2 * (tm + tn) * 8 + 2 * tm * 4            # norms / labels / out blocks
        need += 3 * tm * acc_w * 4                        # accumulators
        need += 6 * tm * tn * 4                           # f32 tile intermediates headroom
        return need <= int(vmem_budget * 0.75)

    tm = tn
    for cand in (1024, 512):              # bigger tm -> fewer passes over the candidates
        if n_pad % cand == 0 and n_pad // cand >= 2 and fits(cand):
            tm = cand
            break
    return tm, tn, n_pad


def triplet_loss(xs, ys, margin=MARGIN):
    n, d = xs.shape
    d_pad = _round_up(d, 128)             # zero-pad D (adds 0 to Gram and norms)
    vmem_budget = _vmem_limit_bytes()
    tm, tn, n_pad = _pick_tiles(n, d_pad, jnp.dtype(xs.dtype).itemsize, vmem_budget)

    xs_p = xs                             # keep native dtype (bf16 stays bf16)
    if (n_pad != n) or (d_pad != d):
        xs_p = jnp.pad(xs, ((0, n_pad - n), (0, d_pad - d)))
    xs_t = xs_p.T                         # (d_pad, n_pad): K-major RHS for the MXU

    # squared norms computed once, in f32
    sq = jnp.sum(jnp.square(xs_p.astype(jnp.float32)), axis=1)
    sq_col = sq.reshape(n_pad, 1)
    sq_row = sq.reshape(1, n_pad)

    pad_label = jnp.iinfo(jnp.int32).min  # never equal to a real label
    ys_i32 = ys.astype(jnp.int32).reshape(n)
    if n_pad != n:
        ys_i32 = jnp.pad(ys_i32, (0, n_pad - n), constant_values=pad_label)
    ys_col = ys_i32.reshape(n_pad, 1)
    ys_row = ys_i32.reshape(1, n_pad)

    acc_w = 128 if (tn % 128 == 0 and tn >= 128) else tn
    groups = tn // acc_w

    kernel = functools.partial(
        _triplet_tile_kernel, n=n, n_pad=n_pad, acc_w=acc_w, groups=groups,
        margin=float(margin))

    hinge = pl.pallas_call(
        kernel,
        out_shape=jax.ShapeDtypeStruct((n_pad, 1), jnp.float32),
        grid_spec=pltpu.PrefetchScalarGridSpec(
            num_scalar_prefetch=0,
            grid=(n_pad // tm, n_pad // tn),
            in_specs=[
                pl.BlockSpec((tm, d_pad), lambda i, j: (i, 0)),   # anchor rows
                pl.BlockSpec((d_pad, tn), lambda i, j: (0, j)),   # candidates (K-major)
                pl.BlockSpec((tm, 1), lambda i, j: (i, 0)),       # |x_i|^2
                pl.BlockSpec((1, tn), lambda i, j: (0, j)),       # |x_j|^2
                pl.BlockSpec((tm, 1), lambda i, j: (i, 0)),       # labels (column)
                pl.BlockSpec((1, tn), lambda i, j: (0, j)),       # labels (row)
            ],
            out_specs=pl.BlockSpec((tm, 1), lambda i, j: (i, 0)),
            scratch_shapes=[pltpu.VMEM((tm, acc_w), jnp.float32)] * 3,
        ),
        compiler_params=pltpu.CompilerParams(
            dimension_semantics=("parallel", "arbitrary"),
            vmem_limit_bytes=vmem_budget,
        ),
    )(xs_p, xs_t, sq_col, sq_row, ys_col, ys_row)

    # Tiny final reduce over the real anchors (padded rows discarded here).
    return jnp.mean(hinge[:n, 0])


def triplet_loss_ref(xs, ys, margin=MARGIN):
    # pure-JAX reference mirroring the PyTorch module
    x = xs.astype(jnp.float32)
    sq = jnp.sum(x * x, axis=1, keepdims=True)
    dist = jnp.sqrt(jnp.maximum(sq + sq.T - 2.0 * (x @ x.T), 1e-10))
    same = (ys[:, None] == ys[None, :]).astype(jnp.float32)
    diff = 1.0 - same
    dist_ap = jnp.sum(dist * same, axis=1) / jnp.sum(same, axis=1)
    dist_an = jnp.sum(dist * diff, axis=1) / jnp.sum(diff, axis=1)
    return jnp.mean(jnp.maximum(dist_ap - dist_an + margin, 0.0))


if __name__ == "__main__":
    key = jax.random.PRNGKey(0)

    # Test 1: tiny single-tile path (n=8, d=32)
    n1, d1 = 8, 32
    xs1 = jax.random.normal(key, (n1, d1), dtype=jnp.float32)
    ys1 = jnp.array([0, 0, 1, 1, 2, 2, 3, 3], dtype=jnp.int32)
    loss1 = jax.block_until_ready(triplet_loss(xs1, ys1))
    ref1 = jax.block_until_ready(triplet_loss_ref(xs1, ys1))
    assert jnp.isfinite(loss1), "non-finite loss (test 1)"
    assert abs(float(loss1) - float(ref1)) < 2e-3, (float(loss1), float(ref1))

    # Test 2: small batch split into 2 anchor blocks + padding correction
    n2, d2 = 30, 20
    xs2 = jax.random.normal(jax.random.fold_in(key, 1), (n2, d2), dtype=jnp.float32)
    ys2 = (jnp.arange(n2) % 5).astype(jnp.int32)
    loss2 = jax.block_until_ready(triplet_loss(xs2, ys2))
    ref2 = jax.block_until_ready(triplet_loss_ref(xs2, ys2))
    assert jnp.isfinite(loss2), "non-finite loss (test 2)"
    assert abs(float(loss2) - float(ref2)) < 2e-3, (float(loss2), float(ref2))

    # Test 3: multi-block 2x2 grid + batch/feature padding (n=300, d=48)
    n3, d3 = 300, 48
    xs3 = jax.random.normal(jax.random.fold_in(key, 2), (n3, d3), dtype=jnp.float32)
    ys3 = (jnp.arange(n3) % 20).astype(jnp.int32)
    loss3 = jax.block_until_ready(triplet_loss(xs3, ys3))
    ref3 = jax.block_until_ready(triplet_loss_ref(xs3, ys3))
    assert jnp.isfinite(loss3), "non-finite loss (test 3)"
    assert abs(float(loss3) - float(ref3)) < 2e-3, (float(loss3), float(ref3))

    print("KERNEL_OK")
</pallas_src>

<mosaic_0001>
module attributes {stable_mosaic.version = 11 : i64} {
  func.func @_triplet_tile_kernel(%arg0: i32, %arg1: i32, %arg2: memref<8x128xf32, #tpu.memory_space<vmem>>, %arg3: memref<128x8xf32, #tpu.memory_space<vmem>>, %arg4: memref<8x1xf32, #tpu.memory_space<vmem>>, %arg5: memref<1x8xf32, #tpu.memory_space<vmem>>, %arg6: memref<8x1xi32, #tpu.memory_space<vmem>>, %arg7: memref<1x8xi32, #tpu.memory_space<vmem>>, %arg8: memref<8x1xf32, #tpu.memory_space<vmem>>, %arg9: memref<8x8xf32, #tpu.memory_space<vmem>>, %arg10: memref<8x8xf32, #tpu.memory_space<vmem>>, %arg11: memref<8x8xf32, #tpu.memory_space<vmem>>) attributes {dimension_semantics = [#tpu.dimension_semantics<parallel>, #tpu.dimension_semantics<arbitrary>], iteration_bounds = array<i64: 1, 1>, scalar_prefetch = 0 : i64, scratch_operands = 3 : i64, tpu.core_type = #tpu.core_type<tc>, window_params = [{transform_indices = @transform_0, window_bounds = array<i64: 8, 128>}, {transform_indices = @transform_1, window_bounds = array<i64: 128, 8>}, {transform_indices = @transform_2, window_bounds = array<i64: 8, 1>}, {transform_indices = @transform_3, window_bounds = array<i64: 1, 8>}, {transform_indices = @transform_4, window_bounds = array<i64: 8, 1>}, {transform_indices = @transform_5, window_bounds = array<i64: 1, 8>}, {transform_indices = @transform_6, window_bounds = array<i64: 8, 1>}]} {
    %c0_i32 = arith.constant 0 : i32
    %0 = arith.cmpi eq, %arg1, %c0_i32 : i32
    %1 = arith.extui %0 : i1 to i32
    %c0_i32_0 = arith.constant 0 : i32
    %2 = arith.cmpi ne, %1, %c0_i32_0 : i32
    scf.if %2 {
      %cst_28 = arith.constant 0.000000e+00 : f32
      %37 = vector.broadcast %cst_28 : f32 to vector<8x8xf32>
      %c0_29 = arith.constant 0 : index
      %c0_30 = arith.constant 0 : index
      %38 = vector.load %arg9[%c0_29, %c0_30] : memref<8x8xf32, #tpu.memory_space<vmem>>, vector<8x8xf32>
      tpu.vector_store %arg9[%c0_29, %c0_30], %37 {strides = array<i32>} : memref<8x8xf32, #tpu.memory_space<vmem>>, vector<8x8xf32>,
      %cst_31 = arith.constant 0.000000e+00 : f32
      %39 = vector.broadcast %cst_31 : f32 to vector<8x8xf32>
      %c0_32 = arith.constant 0 : index
      %c0_33 = arith.constant 0 : index
      %40 = vector.load %arg10[%c0_32, %c0_33] : memref<8x8xf32, #tpu.memory_space<vmem>>, vector<8x8xf32>
      tpu.vector_store %arg10[%c0_32, %c0_33], %39 {strides = array<i32>} : memref<8x8xf32, #tpu.memory_space<vmem>>, vector<8x8xf32>,
      %cst_34 = arith.constant 0.000000e+00 : f32
      %41 = vector.broadcast %cst_34 : f32 to vector<8x8xf32>
      %c0_35 = arith.constant 0 : index
      %c0_36 = arith.constant 0 : index
      %42 = vector.load %arg11[%c0_35, %c0_36] : memref<8x8xf32, #tpu.memory_space<vmem>>, vector<8x8xf32>
      tpu.vector_store %arg11[%c0_35, %c0_36], %41 {strides = array<i32>} : memref<8x8xf32, #tpu.memory_space<vmem>>, vector<8x8xf32>,
    } else {
    }
    %c0 = arith.constant 0 : index
    %c0_1 = arith.constant 0 : index
    %3 = vector.load %arg2[%c0, %c0_1] : memref<8x128xf32, #tpu.memory_space<vmem>>, vector<8x128xf32>
    %c0_2 = arith.constant 0 : index
    %c0_3 = arith.constant 0 : index
    %4 = vector.load %arg3[%c0_2, %c0_3] : memref<128x8xf32, #tpu.memory_space<vmem>>, vector<128x8xf32>
    %cst = arith.constant dense<0.000000e+00> : vector<8x8xf32>
    %5 = tpu.matmul %3, %4, %cst {dimension_numbers = #tpu.dot_dimension_numbers<[1], [0], [0], [1], [0, 0, 1, 1], [], []>} : vector<8x128xf32>, vector<128x8xf32>, vector<8x8xf32> -> vector<8x8xf32>
    %c0_4 = arith.constant 0 : index
    %c0_5 = arith.constant 0 : index
    %6 = vector.load %arg4[%c0_4, %c0_5] : memref<8x1xf32, #tpu.memory_space<vmem>>, vector<8x1xf32>
    %c0_6 = arith.constant 0 : index
    %c0_7 = arith.constant 0 : index
    %7 = vector.load %arg5[%c0_6, %c0_7] : memref<1x8xf32, #tpu.memory_space<vmem>>, vector<1x8xf32>
    %8 = vector.broadcast %6 : vector<8x1xf32> to vector<8x8xf32>
    %9 = vector.broadcast %7 : vector<1x8xf32> to vector<8x8xf32>
    %10 = arith.addf %8, %9 : vector<8x8xf32>
    %cst_8 = arith.constant 2.000000e+00 : f32
    %11 = vector.broadcast %cst_8 : f32 to vector<8x8xf32>
    %12 = arith.mulf %11, %5 : vector<8x8xf32>
    %13 = arith.subf %10, %12 : vector<8x8xf32>
    %cst_9 = arith.constant 1.000000e-10 : f32
    %14 = vector.broadcast %cst_9 : f32 to vector<8x8xf32>
    %15 = arith.maximumf %13, %14 : vector<8x8xf32>
    %16 = math.sqrt %15 : vector<8x8xf32>
    %c0_10 = arith.constant 0 : index
    %c0_11 = arith.constant 0 : index
    %17 = vector.load %arg6[%c0_10, %c0_11] : memref<8x1xi32, #tpu.memory_space<vmem>>, vector<8x1xi32>
    %c0_12 = arith.constant 0 : index
    %c0_13 = arith.constant 0 : index
    %18 = vector.load %arg7[%c0_12, %c0_13] : memref<1x8xi32, #tpu.memory_space<vmem>>, vector<1x8xi32>
    %19 = vector.broadcast %17 : vector<8x1xi32> to vector<8x8xi32>
    %20 = vector.broadcast %18 : vector<1x8xi32> to vector<8x8xi32>
    %21 = arith.cmpi eq, %19, %20 : vector<8x8xi32>
    %22 = arith.extui %21 : vector<8x8xi1> to vector<8x8xi32>
    %23 = arith.sitofp %22 : vector<8x8xi32> to vector<8x8xf32>
    %c0_14 = arith.constant 0 : index
    %c0_15 = arith.constant 0 : index
    %24 = vector.load %arg9[%c0_14, %c0_15] : memref<8x8xf32, #tpu.memory_space<vmem>>, vector<8x8xf32>
    %25 = arith.mulf %16, %23 : vector<8x8xf32>
    %26 = arith.addf %24, %25 : vector<8x8xf32>
    %c0_16 = arith.constant 0 : index
    %c0_17 = arith.constant 0 : index
    %27 = vector.load %arg9[%c0_16, %c0_17] : memref<8x8xf32, #tpu.memory_space<vmem>>, vector<8x8xf32>
    tpu.vector_store %arg9[%c0_16, %c0_17], %26 {strides = array<i32>} : memref<8x8xf32, #tpu.memory_space<vmem>>, vector<8x8xf32>,
    %c0_18 = arith.constant 0 : index
    %c0_19 = arith.constant 0 : index
    %28 = vector.load %arg10[%c0_18, %c0_19] : memref<8x8xf32, #tpu.memory_space<vmem>>, vector<8x8xf32>
    %29 = arith.addf %28, %16 : vector<8x8xf32>
    %c0_20 = arith.constant 0 : index
    %c0_21 = arith.constant 0 : index
    %30 = vector.load %arg10[%c0_20, %c0_21] : memref<8x8xf32, #tpu.memory_space<vmem>>, vector<8x8xf32>
    tpu.vector_store %arg10[%c0_20, %c0_21], %29 {strides = array<i32>} : memref<8x8xf32, #tpu.memory_space<vmem>>, vector<8x8xf32>,
    %c0_22 = arith.constant 0 : index
    %c0_23 = arith.constant 0 : index
    %31 = vector.load %arg11[%c0_22, %c0_23] : memref<8x8xf32, #tpu.memory_space<vmem>>, vector<8x8xf32>
    %32 = arith.addf %31, %23 : vector<8x8xf32>
    %c0_24 = arith.constant 0 : index
    %c0_25 = arith.constant 0 : index
    %33 = vector.load %arg11[%c0_24, %c0_25] : memref<8x8xf32, #tpu.memory_space<vmem>>, vector<8x8xf32>
    tpu.vector_store %arg11[%c0_24, %c0_25], %32 {strides = array<i32>} : memref<8x8xf32, #tpu.memory_space<vmem>>, vector<8x8xf32>,
    %c0_i32_26 = arith.constant 0 : i32
    %34 = arith.cmpi eq, %arg1, %c0_i32_26 : i32
    %35 = arith.extui %34 : i1 to i32
    %c0_i32_27 = arith.constant 0 : i32
    %36 = arith.cmpi ne, %35, %c0_i32_27 : i32
    scf.if %36 {
      %c0_28 = arith.constant 0 : index
      %c0_29 = arith.constant 0 : index
      %37 = vector.load %arg9[%c0_28, %c0_29] : memref<8x8xf32, #tpu.memory_space<vmem>>, vector<8x8xf32>
      %cst_30 = arith.constant dense<0.000000e+00> : vector<8xf32>
      %38 = vector.multi_reduction <add>, %37, %cst_30 [1] : vector<8x8xf32> to vector<8xf32>
      %39 = vector.shape_cast %38 : vector<8xf32> to vector<8x1xf32>
      %c0_31 = arith.constant 0 : index
      %c0_32 = arith.constant 0 : index
      %40 = vector.load %arg10[%c0_31, %c0_32] : memref<8x8xf32, #tpu.memory_space<vmem>>, vector<8x8xf32>
      %cst_33 = arith.constant dense<0.000000e+00> : vector<8xf32>
      %41 = vector.multi_reduction <add>, %40, %cst_33 [1] : vector<8x8xf32> to vector<8xf32>
      %42 = vector.shape_cast %41 : vector<8xf32> to vector<8x1xf32>
      %c0_34 = arith.constant 0 : index
      %c0_35 = arith.constant 0 : index
      %43 = vector.load %arg11[%c0_34, %c0_35] : memref<8x8xf32, #tpu.memory_space<vmem>>, vector<8x8xf32>
      %cst_36 = arith.constant dense<0.000000e+00> : vector<8xf32>
      %44 = vector.multi_reduction <add>, %43, %cst_36 [1] : vector<8x8xf32> to vector<8xf32>
      %45 = vector.shape_cast %44 : vector<8xf32> to vector<8x1xf32>
      %46 = arith.subf %42, %39 : vector<8x1xf32>
      %cst_37 = arith.constant 8.000000e+00 : f32
      %47 = vector.broadcast %cst_37 : f32 to vector<8x1xf32>
      %48 = arith.subf %47, %45 : vector<8x1xf32>
      %cst_38 = arith.constant 1.000000e+00 : f32
      %49 = vector.broadcast %cst_38 : f32 to vector<8x1xf32>
      %50 = arith.maximumf %45, %49 : vector<8x1xf32>
      %51 = tpu.reciprocal %50 {approx = true} : vector<8x1xf32> -> vector<8x1xf32>
      %52 = arith.mulf %50, %51 : vector<8x1xf32>
      %cst_39 = arith.constant 2.000000e+00 : f32
      %53 = vector.broadcast %cst_39 : f32 to vector<8x1xf32>
      %54 = arith.subf %53, %52 : vector<8x1xf32>
      %55 = arith.mulf %51, %54 : vector<8x1xf32>
      %56 = arith.mulf %39, %55 : vector<8x1xf32>
      %cst_40 = arith.constant 1.000000e+00 : f32
      %57 = vector.broadcast %cst_40 : f32 to vector<8x1xf32>
      %58 = arith.maximumf %48, %57 : vector<8x1xf32>
      %59 = tpu.reciprocal %58 {approx = true} : vector<8x1xf32> -> vector<8x1xf32>
      %60 = arith.mulf %58, %59 : vector<8x1xf32>
      %cst_41 = arith.constant 2.000000e+00 : f32
      %61 = vector.broadcast %cst_41 : f32 to vector<8x1xf32>
      %62 = arith.subf %61, %60 : vector<8x1xf32>
      %63 = arith.mulf %59, %62 : vector<8x1xf32>
      %64 = arith.mulf %46, %63 : vector<8x1xf32>
      %65 = arith.subf %56, %64 : vector<8x1xf32>
      %cst_42 = arith.constant 5.000000e-01 : f32
      %66 = vector.broadcast %cst_42 : f32 to vector<8x1xf32>
      %67 = arith.addf %65, %66 : vector<8x1xf32>
      %cst_43 = arith.constant 0.000000e+00 : f32
      %68 = vector.broadcast %cst_43 : f32 to vector<8x1xf32>
      %69 = arith.maximumf %67, %68 : vector<8x1xf32>
      %c0_44 = arith.constant 0 : index
      %c0_45 = arith.constant 0 : index
      %70 = vector.load %arg8[%c0_44, %c0_45] : memref<8x1xf32, #tpu.memory_space<vmem>>, vector<8x1xf32>
      tpu.vector_store %arg8[%c0_44, %c0_45], %69 {strides = array<i32>} : memref<8x1xf32, #tpu.memory_space<vmem>>, vector<8x1xf32>,
    } else {
    }
    return
  }
  func.func @transform_0(%arg0: i32, %arg1: i32) -> (i32, i32) {
    %c0_i32 = arith.constant 0 : i32
    %c0_i32_0 = arith.constant 0 : i32
    return %arg0, %c0_i32 : i32, i32
  }
  func.func @transform_1(%arg0: i32, %arg1: i32) -> (i32, i32) {
    %c0_i32 = arith.constant 0 : i32
    %c0_i32_0 = arith.constant 0 : i32
    return %c0_i32, %arg1 : i32, i32
  }
  func.func @transform_2(%arg0: i32, %arg1: i32) -> (i32, i32) {
    %c0_i32 = arith.constant 0 : i32
    %c0_i32_0 = arith.constant 0 : i32
    return %arg0, %c0_i32 : i32, i32
  }
  func.func @transform_3(%arg0: i32, %arg1: i32) -> (i32, i32) {
    %c0_i32 = arith.constant 0 : i32
    %c0_i32_0 = arith.constant 0 : i32
    return %c0_i32, %arg1 : i32, i32
  }
  func.func @transform_4(%arg0: i32, %arg1: i32) -> (i32, i32) {
    %c0_i32 = arith.constant 0 : i32
    %c0_i32_0 = arith.constant 0 : i32
    return %arg0, %c0_i32 : i32, i32
  }
  func.func @transform_5(%arg0: i32, %arg1: i32) -> (i32, i32) {
    %c0_i32 = arith.constant 0 : i32
    %c0_i32_0 = arith.constant 0 : i32
    return %c0_i32, %arg1 : i32, i32
  }
  func.func @transform_6(%arg0: i32, %arg1: i32) -> (i32, i32) {
    %c0_i32 = arith.constant 0 : i32
    %c0_i32_0 = arith.constant 0 : i32
    return %arg0, %c0_i32 : i32, i32
  }
}

</mosaic_0001>

<llo_original>
// kernel: tpu_custom_call.1
$region0: #{tpu_custom_call.1}
  #allocation0 [shape = 'u32[]', space=smem, size = 0x4, offset = 0x4, fixed_abs, tag = 'smem constant byte address 0x4 - core index']
  #allocation1 [shape = 'u32[72,128]{1,0:T(1,128)}', space=vmem, size = 0x9000, scoped, tag = 'internal scratch']
  #allocation2 [shape = 'f32[8,8]{1,0:T(8,128)}', space=vmem, size = 0x1000, scoped, tag = 'scratch operand']
  #allocation3 [shape = 'f32[8,8]{1,0:T(8,128)}', space=vmem, size = 0x1000, scoped, tag = 'scratch operand']
  #allocation4 [shape = 'f32[8,8]{1,0:T(8,128)}', space=vmem, size = 0x1000, scoped, tag = 'scratch operand']
  %s0 = inlined_call_operand.vmem [shape: f32[8,128], index: 0, kind: input, shape index: {}]
  %s1 = inlined_call_operand.vmem [shape: f32[128,8], index: 1, kind: input, shape index: {}]
  %s2 = inlined_call_operand.vmem [shape: f32[8,1], index: 2, kind: input, shape index: {}]
  %s3 = inlined_call_operand.vmem [shape: f32[1,8], index: 3, kind: input, shape index: {}]
  %s4 = inlined_call_operand.vmem [shape: s32[8,1], index: 4, kind: input, shape index: {}]
  %s5 = inlined_call_operand.vmem [shape: s32[1,8], index: 5, kind: input, shape index: {}]
  %s6 = inlined_call_operand.vmem [shape: f32[8,1], index: 6, kind: output, shape index: {}]
  %s7 = sld [smem:[#allocation0]]
  $region42: #{tpu_custom_call.1} parent=0
    _
  %s9 = ssub.s32 1, %s7
  %s10 = scalar_select 0, %s9, %s7
  // Predicated region
  $region2: #{tpu_custom_call.1} parent=0 // pred_check
    _
  $region3: #{tpu_custom_call.1} parent=0 // pred_check_branch
    %12 = sbr.rel (0) target = $region5
  $region4: #{tpu_custom_call.1} parent=0 // pred_region
    _
  $region5: #{tpu_custom_call.1} parent=0 // pred_fallthru
    _
  // Predicated region
  $region6: #{tpu_custom_call.1} parent=0 // pred_check
    _
  $region7: #{tpu_custom_call.1} parent=0 // pred_check_branch
    %14 = sbr.rel (0) target = $region9
  $region8: #{tpu_custom_call.1} parent=0 // pred_region
    _
  $region9: #{tpu_custom_call.1} parent=0 // pred_fallthru
    _
  // Predicated region
  $region10: #{tpu_custom_call.1} parent=0 // pred_check
    _
  $region11: #{tpu_custom_call.1} parent=0 // pred_check_branch
    %16 = sbr.rel (0) target = $region13
  $region12: #{tpu_custom_call.1} parent=0 // pred_region
    _
  $region13: #{tpu_custom_call.1} parent=0 // pred_fallthru
    _
  // Predicated region
  $region14: #{tpu_custom_call.1} parent=0 // pred_check
    _
  $region15: #{tpu_custom_call.1} parent=0 // pred_check_branch
    %18 = sbr.rel (0) target = $region17
  $region16: #{tpu_custom_call.1} parent=0 // pred_region
    _
  $region17: #{tpu_custom_call.1} parent=0 // pred_fallthru
    _
  // Predicated region
  $region18: #{tpu_custom_call.1} parent=0 // pred_check
    _
  $region19: #{tpu_custom_call.1} parent=0 // pred_check_branch
    %20 = sbr.rel (0) target = $region21
  $region20: #{tpu_custom_call.1} parent=0 // pred_region
    _
  $region21: #{tpu_custom_call.1} parent=0 // pred_fallthru
    _
  // Predicated region
  $region22: #{tpu_custom_call.1} parent=0 // pred_check
    _
  $region23: #{tpu_custom_call.1} parent=0 // pred_check_branch
    %22 = sbr.rel (0) target = $region25
  $region24: #{tpu_custom_call.1} parent=0 // pred_region
    _
  $region25: #{tpu_custom_call.1} parent=0 // pred_fallthru
    _
  %p23 = scmp.eq.s32.totalorder 0, 0
  // Predicated region
  $region26: #{tpu_custom_call.1} parent=0 // pred_check
    %p24 = pneg %p23
  $region27: #{tpu_custom_call.1} parent=0 // pred_check_branch
    %26 = sbr.rel (%p24) target = $region29
  $region28: #{tpu_custom_call.1} parent=0 // pred_region
    %vm27 = vcmask 64512
    %28 = vst.msk [vmem:[#allocation2] sm:$0xff] %vm27, 0.0
    %29 = vst.msk [vmem:[#allocation3] sm:$0xff] %vm27, 0.0
    %30 = vst.msk [vmem:[#allocation4] sm:$0xff] %vm27, 0.0
  $region29: #{tpu_custom_call.1} parent=0 // pred_fallthru
    _
  %v31 = vld [vmem:[%s0] sm:$0xff]
  %v32 = vld [vmem:[%s1] sm:$0xff]
  %v33 = vld [vmem:[%s1 + $0x8] sm:$0xff]
  %v34 = vld [vmem:[%s1 + $0x10] sm:$0xff]
  %v35 = vld [vmem:[%s1 + $0x18] sm:$0xff]
  %v36 = vld [vmem:[%s1 + $0x20] sm:$0xff]
  %v37 = vld [vmem:[%s1 + $0x28] sm:$0xff]
  %v38 = vld [vmem:[%s1 + $0x30] sm:$0xff]
  %v39 = vld [vmem:[%s1 + $0x38] sm:$0xff]
  %v40 = vld [vmem:[%s1 + $0x40] sm:$0xff]
  %v41 = vld [vmem:[%s1 + $0x48] sm:$0xff]
  %v42 = vld [vmem:[%s1 + $0x50] sm:$0xff]
  %v43 = vld [vmem:[%s1 + $0x58] sm:$0xff]
  %v44 = vld [vmem:[%s1 + $0x60] sm:$0xff]
  %v45 = vld [vmem:[%s1 + $0x68] sm:$0xff]
  %v46 = vld [vmem:[%s1 + $0x70] sm:$0xff]
  %v47 = vld [vmem:[%s1 + $0x78] sm:$0xff]
  %48 = vmatpush.msra.mxu0 %v47
  %49 = vmatpush.msra.mxu0 %v46
  %50 = vmatpush.msra.mxu0 %v45
  %51 = vmatpush.msra.mxu0 %v44
  %52 = vmatpush.msra.mxu0 %v43
  %53 = vmatpush.msra.mxu0 %v42
  %54 = vmatpush.msra.mxu0 %v41
  %55 = vmatpush.msra.mxu0 %v40
  %56 = vmatpush.msra.mxu0 %v39
  %57 = vmatpush.msra.mxu0 %v38
  %58 = vmatpush.msra.mxu0 %v37
  %59 = vmatpush.msra.mxu0 %v36
  %60 = vmatpush.msra.mxu0 %v35
  %61 = vmatpush.msra.mxu0 %v34
  %62 = vmatpush.msra.mxu0 %v33
  %63 = vmatpush.msra.mxu0 %v32
  %64 = vmatmul.f32.gmra.mxu0 %v31
  %v65 = vpop.f32.mrf.mxu0
  %v66 = vadd.f32 0.0, %v65
  %67 = vdwg.mxu0
  %v68 = vld [vmem:[%s2] sm:$0xff]
  %v69 = vld [vmem:[%s3] sm:$0x1]
  %71 = vset.pattern.permute.xlu0 0
  %72 = vperm.xlu0 %71, %v68
  %v73 = vpop.permute.xlu0 %72
  %v76 = vperm.slane %v69, 0
  %v78 = vadd.f32 %v73, %v76
  %v79 = vmul.f32 %v66, 2.0
  %v80 = vsub.f32 %v78, %v79
  %v81 = vmax.f32 %v80, 1e-10
  %v82 = vrsqrt.pop %v81
  %v83 = vmul.f32 %v82, %v81
  %v84 = vmul.f32 %v83, %v82
  %v85 = vmul.f32 0.5, %v84
  %v86 = vsub.f32 1.5, %v85
  %v87 = vmul.f32 %v82, %v86
  %v88 = vmul.f32 %v81, %v87
  %vm89 = vcmp.eq.f32.partialorder %v81, inf
  %v90 = vsel %vm89, %v81, %v88
  %vm91 = vcmp.eq.f32.partialorder %v81, 0.0
  %v92 = vand.u32 %v81, 2147483648
  %v93 = vsel %vm91, %v92, %v90
  %v94 = vld [vmem:[%s4] sm:$0xff]
  %v95 = vld [vmem:[%s5] sm:$0x1]
  %96 = vset.pattern.permute.xlu0 0
  %97 = vperm.xlu0 %96, %v94
  %v98 = vpop.permute.xlu0 %97
  %v99 = vperm.slane %v95, 0
  %vm100 = vcmp.eq.s32.totalorder %v98, %v99
  %v101 = vsel %vm100, 1, 0
  %v102 = vcvt.s32.f32 %v101
  %v103 = vld [vmem:[#allocation2] sm:$0xff]
  %v104 = vmul.f32 %v93, %v102
  %v105 = vadd.f32 %v103, %v104
  %vm106 = vcmask 64512
  %107 = vst.msk [vmem:[#allocation2] sm:$0xff] %vm106, %v105
  %v108 = vld [vmem:[#allocation3] sm:$0xff]
  %v109 = vadd.f32 %v108, %v93
  %110 = vst.msk [vmem:[#allocation3] sm:$0xff] %vm106, %v109
  %v111 = vld [vmem:[#allocation4] sm:$0xff]
  %v112 = vadd.f32 %v111, %v102
  %113 = vst.msk [vmem:[#allocation4] sm:$0xff] %vm106, %v112
  // Predicated region
  $region30: #{tpu_custom_call.1} parent=0 // pred_check
    %p114 = pneg %p23
  $region31: #{tpu_custom_call.1} parent=0 // pred_check_branch
    %116 = sbr.rel (%p114) target = $region33
  $region32: #{tpu_custom_call.1} parent=0 // pred_region
    %v117 = vld [vmem:[#allocation2] sm:$0xff]
    %v118 = vsel %vm106, %v117, 0.0
    %119 = vadd.xlane.f32.xlu0 %v118
    %v120 = vpop.xlane.xlu0 %119
    %v121 = vld [vmem:[#allocation3] sm:$0xff]
    %v122 = vsel %vm106, %v121, 0.0
    %123 = vadd.xlane.f32.xlu0 %v122
    %v124 = vpop.xlane.xlu0 %123
    %v125 = vld [vmem:[#allocation4] sm:$0xff]
    %v126 = vsel %vm106, %v125, 0.0
    %127 = vadd.xlane.f32.xlu0 %v126
    %v128 = vpop.xlane.xlu0 %127
    %v129 = vsub.f32 %v124, %v120
    %v130 = vsub.f32 8.0, %v128
    %v131 = vmax.f32 %v128, 1.0
    %v132 = vrcp.pop %v131
    %v133 = vmul.f32 %v131, %v132
    %v134 = vsub.f32 2.0, %v133
    %v135 = vmul.f32 %v132, %v134
    %v136 = vmul.f32 %v120, %v135
    %v137 = vmax.f32 %v130, 1.0
    %v138 = vrcp.pop %v137
    %v139 = vmul.f32 %v137, %v138
    %v140 = vsub.f32 2.0, %v139
    %v141 = vmul.f32 %v138, %v140
    %v142 = vmul.f32 %v129, %v141
    %v143 = vsub.f32 %v136, %v142
    %v144 = vadd.f32 %v143, 0.5
    %v145 = vmax.f32 %v144, 0.0
    %vm146 = vcmask 7168
    %147 = vst.msk [vmem:[%s6] sm:$0xff] %vm146, %v145
  $region33: #{tpu_custom_call.1} parent=0 // pred_fallthru
    _
  // Predicated region
  $region34: #{tpu_custom_call.1} parent=0 // pred_check
    _
  $region35: #{tpu_custom_call.1} parent=0 // pred_check_branch
    %149 = sbr.rel (0) target = $region37
  $region36: #{tpu_custom_call.1} parent=0 // pred_region
    _
  $region37: #{tpu_custom_call.1} parent=0 // pred_fallthru
    _
  // Predicated region
  $region38: #{tpu_custom_call.1} parent=0 // pred_check
    _
  $region39: #{tpu_custom_call.1} parent=0 // pred_check_branch
    %151 = sbr.rel (0) target = $region41
  $region40: #{tpu_custom_call.1} parent=0 // pred_region
    _
  $region41: #{tpu_custom_call.1} parent=0 // pred_fallthru
    _

</llo_original>
